<compile_context>
chip_gen: v7x
topology: tpu7x:2x2x1
jax: 0.10.0
libtpu: 0.0.40
codegen_flags: <defaults>
</compile_context>

<pallas_src>
import functools

import jax
import jax.numpy as jnp
from jax.experimental import pallas as pl
from jax.experimental.pallas import tpu as pltpu


# ----------------------------------------------------------------------------
# Fused kernel: synthetic LLM trunk + mean-pool + features + multi-task head.
# ----------------------------------------------------------------------------
def basenet_fused_kernel(x_ref, w1_ref, b1_ref, w2_ref, b2_ref,
                         wfc_ref, bfc_ref, mask_ref, r_ref,
                         feat_ref, logits_ref, *, bm, S):
    # ---- trunk: h = gelu(x @ W1 + b1)  (bf16 MXU inputs, f32 accumulate) ------------
    h = jnp.dot(x_ref[...], w1_ref[...],
                preferred_element_type=jnp.float32) + b1_ref[...]        # [bm*S, H] f32
    h = jax.nn.gelu(h, approximate=True)
    # TODO(synk): the real RoBERTa/LLaMA trunk uses exact GELU; tanh approx kept for the
    # synthetic stand-in.

    # ---- mean-pool hoisted BEFORE the second matmul (algebraically exact) -----------
    pooled = jnp.mean(h.reshape(bm, S, -1), axis=1)                      # [bm, H] f32

    # ---- features = pooled @ W2 + b2 -------------------------------------------------
    feats = jnp.dot(pooled.astype(jnp.bfloat16), w2_ref[...],
                    preferred_element_type=jnp.float32) + b2_ref[...]    # [bm, D] f32
    feat_ref[...] = feats

    # ---- global_fc: one lane-dense matmul against ALL task heads ---------------------
    # wfc: [D, T*C padded to 128]; bfc carries every task's bias.
    logits_all = jnp.dot(feats.astype(jnp.bfloat16), wfc_ref[...],
                         preferred_element_type=jnp.float32) + bfc_ref[...]  # [bm, TCp]
    # One-hot task mask zeroes every head except task_ids[b]; R compacts the surviving
    # C-wide slice back to [bm, C]  (R[t*C + c, c'] = (c == c'), padded rows are zero).
    sel = logits_all * mask_ref[...]
    logits_ref[...] = jnp.dot(sel, r_ref[...], preferred_element_type=jnp.float32)


# ----------------------------------------------------------------------------
# BaseNet.forward equivalent.
# ----------------------------------------------------------------------------
def basenet_forward(task_ids, head_ids, inputs_embeds, params, *, batch_block=None):
    # TODO(synk): head_ids routing is undefined in the reference (generate_fc/update_fc
    # are stubs); accepted for interface parity but unused.
    del head_ids
    B, S, H = inputs_embeds.shape
    D = params["w2"].shape[1]
    T, _, C = params["fc_w"].shape

    bm = B if batch_block is None else batch_block       # batch block per grid step
    assert B % bm == 0, "batch_block must divide batch"
    nb = B // bm

    f32, bf16 = jnp.float32, jnp.bfloat16

    # Lane-dense flattened multi-task head: pad T*C up to a multiple of 128 lanes.
    tc = T * C
    tcp = ((tc + 127) // 128) * 128

    x2d = inputs_embeds.reshape(B * S, H).astype(bf16)
    w1 = params["w1"].astype(bf16)
    b1 = params["b1"].reshape(1, H).astype(f32)
    w2 = params["w2"].astype(bf16)
    b2 = params["b2"].reshape(1, D).astype(f32)

    wfc = jnp.transpose(params["fc_w"], (1, 0, 2)).reshape(D, tc)          # [D, T*C]
    wfc = jnp.pad(wfc, ((0, 0), (0, tcp - tc))).astype(bf16)               # [D, tcp]
    bfc = jnp.pad(params["fc_b"].reshape(1, tc).astype(f32),
                  ((0, 0), (0, tcp - tc)))                                  # [1, tcp]

    onehot = jax.nn.one_hot(task_ids.astype(jnp.int32), T, dtype=f32)       # [B, T]
    mask = jnp.pad(jnp.repeat(onehot, C, axis=1), ((0, 0), (0, tcp - tc)))  # [B, tcp]
    r_mat = jnp.pad(jnp.tile(jnp.eye(C, dtype=f32), (T, 1)),
                    ((0, tcp - tc), (0, 0)))                                 # [tcp, C]

    kern = functools.partial(basenet_fused_kernel, bm=bm, S=S)
    grid_spec = pltpu.PrefetchScalarGridSpec(
        num_scalar_prefetch=0,
        grid=(nb,),
        in_specs=[
            pl.BlockSpec((bm * S, H), lambda i: (i, 0)),   # token rows of this batch block
            pl.BlockSpec((H, H), lambda i: (0, 0)),        # W1 (VMEM-resident; at real LLM
            pl.BlockSpec((1, H), lambda i: (0, 0)),        #  sizes add a K grid axis + f32
            pl.BlockSpec((H, D), lambda i: (0, 0)),        #  scratch accumulator and set
            pl.BlockSpec((1, D), lambda i: (0, 0)),        #  vmem_limit_bytes for v7x)
            pl.BlockSpec((D, tcp), lambda i: (0, 0)),      # all task heads, lane-dense
            pl.BlockSpec((1, tcp), lambda i: (0, 0)),      # all task biases
            pl.BlockSpec((bm, tcp), lambda i: (i, 0)),     # one-hot task mask rows
            pl.BlockSpec((tcp, C), lambda i: (0, 0)),      # compaction matrix
        ],
        out_specs=[
            pl.BlockSpec((bm, D), lambda i: (i, 0)),       # features
            pl.BlockSpec((bm, C), lambda i: (i, 0)),       # logits
        ],
    )
    features, logits = pl.pallas_call(
        kern,
        out_shape=(jax.ShapeDtypeStruct((B, D), f32),
                   jax.ShapeDtypeStruct((B, C), f32)),
        grid_spec=grid_spec,
        compiler_params=pltpu.CompilerParams(
            dimension_semantics=("parallel",),   # batch blocks shard across TCs on v7x
        ),
    )(x2d, w1, b1, w2, b2, wfc, bfc, mask, r_mat)

    return {"logits": logits, "features": features}        # out.update(x) semantics


# ----------------------------------------------------------------------------
# Parameters + pure-JAX reference (original op order) for validation.
# ----------------------------------------------------------------------------
def init_params(key, H, D, T, C):
    k1, k2, k3 = jax.random.split(key, 3)
    scale = 0.02
    return {
        "w1": scale * jax.random.normal(k1, (H, H), jnp.float32),
        "b1": jnp.zeros((H,), jnp.float32),
        "w2": scale * jax.random.normal(k2, (H, D), jnp.float32),
        "b2": jnp.zeros((D,), jnp.float32),
        "fc_w": scale * jax.random.normal(k3, (T, D, C), jnp.float32),
        "fc_b": jnp.zeros((T, C), jnp.float32),
    }


def reference_forward(task_ids, inputs_embeds, p):
    """f32 reference with the ORIGINAL op order (pool after 2nd matmul, per-sample
    weight select) to validate the fused / reordered / bf16 Pallas kernel."""
    B, S, H = inputs_embeds.shape
    x = inputs_embeds.reshape(B * S, H)
    h = jax.nn.gelu(x @ p["w1"] + p["b1"], approximate=True)
    z = (h @ p["w2"] + p["b2"]).reshape(B, S, -1)
    feats = z.mean(axis=1)
    w = p["fc_w"][task_ids]                         # [B, D, C]
    b = p["fc_b"][task_ids]                         # [B, C]
    logits = jnp.einsum("bd,bdc->bc", feats, w) + b
    return feats, logits


if __name__ == "__main__":
    B, S, H = 2, 8, 32          # batch, seq, hidden
    D = 32                      # llm.out_dim / feature_dim (synthetic)
    T, C = 3, 16                # number of tasks, classes per head

    key = jax.random.PRNGKey(0)
    k_x, k_p = jax.random.split(key)
    inputs_embeds = jax.random.normal(k_x, (B, S, H), jnp.float32)
    task_ids = jnp.array([0, 2], dtype=jnp.int32)
    head_ids = jnp.array([0, 1], dtype=jnp.int32)
    params = init_params(k_p, H, D, T, C)

    out = basenet_forward(task_ids, head_ids, inputs_embeds, params)
    jax.block_until_ready(out["logits"])
    jax.block_until_ready(out["features"])

    assert out["features"].shape == (B, D)
    assert out["logits"].shape == (B, C)

    ref_feats, ref_logits = reference_forward(task_ids, inputs_embeds, params)
    # Generous tolerances: drift comes only from bf16 MXU inputs (f32 accumulate).
    assert bool(jnp.allclose(out["features"], ref_feats, atol=5e-3, rtol=1e-1))
    assert bool(jnp.allclose(out["logits"], ref_logits, atol=1e-3, rtol=1e-1))

    print("KERNEL_OK")
</pallas_src>

<mosaic_0001>
module attributes {stable_mosaic.version = 11 : i64} {
  func.func @basenet_fused_kernel(%arg0: i32, %arg1: memref<16x32xbf16, #tpu.memory_space<vmem>>, %arg2: memref<32x32xbf16, #tpu.memory_space<vmem>>, %arg3: memref<1x32xf32, #tpu.memory_space<vmem>>, %arg4: memref<32x32xbf16, #tpu.memory_space<vmem>>, %arg5: memref<1x32xf32, #tpu.memory_space<vmem>>, %arg6: memref<32x128xbf16, #tpu.memory_space<vmem>>, %arg7: memref<1x128xf32, #tpu.memory_space<vmem>>, %arg8: memref<2x128xf32, #tpu.memory_space<vmem>>, %arg9: memref<128x16xf32, #tpu.memory_space<vmem>>, %arg10: memref<2x32xf32, #tpu.memory_space<vmem>>, %arg11: memref<2x16xf32, #tpu.memory_space<vmem>>) attributes {dimension_semantics = [#tpu.dimension_semantics<parallel>], iteration_bounds = array<i64: 1>, scalar_prefetch = 0 : i64, scratch_operands = 0 : i64, tpu.core_type = #tpu.core_type<tc>, window_params = [{transform_indices = @transform_0, window_bounds = array<i64: 16, 32>}, {pipeline_mode = #tpu.pipeline_mode<synchronous>, transform_indices = @transform_1, window_bounds = array<i64: 32, 32>}, {pipeline_mode = #tpu.pipeline_mode<synchronous>, transform_indices = @transform_2, window_bounds = array<i64: 1, 32>}, {pipeline_mode = #tpu.pipeline_mode<synchronous>, transform_indices = @transform_3, window_bounds = array<i64: 32, 32>}, {pipeline_mode = #tpu.pipeline_mode<synchronous>, transform_indices = @transform_4, window_bounds = array<i64: 1, 32>}, {pipeline_mode = #tpu.pipeline_mode<synchronous>, transform_indices = @transform_5, window_bounds = array<i64: 32, 128>}, {pipeline_mode = #tpu.pipeline_mode<synchronous>, transform_indices = @transform_6, window_bounds = array<i64: 1, 128>}, {transform_indices = @transform_7, window_bounds = array<i64: 2, 128>}, {pipeline_mode = #tpu.pipeline_mode<synchronous>, transform_indices = @transform_8, window_bounds = array<i64: 128, 16>}, {transform_indices = @transform_9, window_bounds = array<i64: 2, 32>}, {transform_indices = @transform_10, window_bounds = array<i64: 2, 16>}]} {
    %c0 = arith.constant 0 : index
    %c0_0 = arith.constant 0 : index
    %0 = vector.load %arg1[%c0, %c0_0] : memref<16x32xbf16, #tpu.memory_space<vmem>>, vector<16x32xbf16>
    %c0_1 = arith.constant 0 : index
    %c0_2 = arith.constant 0 : index
    %1 = vector.load %arg2[%c0_1, %c0_2] : memref<32x32xbf16, #tpu.memory_space<vmem>>, vector<32x32xbf16>
    %cst = arith.constant dense<0.000000e+00> : vector<16x32xf32>
    %2 = tpu.matmul %0, %1, %cst {dimension_numbers = #tpu.dot_dimension_numbers<[1], [0], [0], [1], [0, 0, 1, 1], [], []>} : vector<16x32xbf16>, vector<32x32xbf16>, vector<16x32xf32> -> vector<16x32xf32>
    %c0_3 = arith.constant 0 : index
    %c0_4 = arith.constant 0 : index
    %3 = vector.load %arg3[%c0_3, %c0_4] : memref<1x32xf32, #tpu.memory_space<vmem>>, vector<1x32xf32>
    %4 = vector.broadcast %3 : vector<1x32xf32> to vector<16x32xf32>
    %5 = arith.addf %2, %4 : vector<16x32xf32>
    %6 = arith.mulf %5, %5 : vector<16x32xf32>
    %7 = arith.mulf %5, %6 : vector<16x32xf32>
    %cst_5 = arith.constant 4.471500e-02 : f32
    %8 = vector.broadcast %cst_5 : f32 to vector<16x32xf32>
    %9 = arith.mulf %8, %7 : vector<16x32xf32>
    %10 = arith.addf %5, %9 : vector<16x32xf32>
    %cst_6 = arith.constant 0.797884583 : f32
    %11 = vector.broadcast %cst_6 : f32 to vector<16x32xf32>
    %12 = arith.mulf %11, %10 : vector<16x32xf32>
    %13 = math.tanh %12 : vector<16x32xf32>
    %cst_7 = arith.constant 1.000000e+00 : f32
    %14 = vector.broadcast %cst_7 : f32 to vector<16x32xf32>
    %15 = arith.addf %14, %13 : vector<16x32xf32>
    %cst_8 = arith.constant 5.000000e-01 : f32
    %16 = vector.broadcast %cst_8 : f32 to vector<16x32xf32>
    %17 = arith.mulf %16, %15 : vector<16x32xf32>
    %18 = arith.mulf %5, %17 : vector<16x32xf32>
    %19 = vector.shape_cast %18 : vector<16x32xf32> to vector<2x8x32xf32>
    %cst_9 = arith.constant dense<0.000000e+00> : vector<2x32xf32>
    %20 = vector.multi_reduction <add>, %19, %cst_9 [1] : vector<2x8x32xf32> to vector<2x32xf32>
    %cst_10 = arith.constant 8.000000e+00 : f32
    %21 = vector.broadcast %cst_10 : f32 to vector<2x32xf32>
    %22 = arith.divf %20, %21 : vector<2x32xf32>
    %23 = arith.truncf %22 : vector<2x32xf32> to vector<2x32xbf16>
    %c0_11 = arith.constant 0 : index
    %c0_12 = arith.constant 0 : index
    %24 = vector.load %arg4[%c0_11, %c0_12] : memref<32x32xbf16, #tpu.memory_space<vmem>>, vector<32x32xbf16>
    %cst_13 = arith.constant dense<0.000000e+00> : vector<2x32xf32>
    %25 = tpu.matmul %23, %24, %cst_13 {dimension_numbers = #tpu.dot_dimension_numbers<[1], [0], [0], [1], [0, 0, 1, 1], [], []>} : vector<2x32xbf16>, vector<32x32xbf16>, vector<2x32xf32> -> vector<2x32xf32>
    %c0_14 = arith.constant 0 : index
    %c0_15 = arith.constant 0 : index
    %26 = vector.load %arg5[%c0_14, %c0_15] : memref<1x32xf32, #tpu.memory_space<vmem>>, vector<1x32xf32>
    %27 = vector.broadcast %26 : vector<1x32xf32> to vector<2x32xf32>
    %28 = arith.addf %25, %27 : vector<2x32xf32>
    %c0_16 = arith.constant 0 : index
    %c0_17 = arith.constant 0 : index
    %29 = vector.load %arg10[%c0_16, %c0_17] : memref<2x32xf32, #tpu.memory_space<vmem>>, vector<2x32xf32>
    tpu.vector_store %arg10[%c0_16, %c0_17], %28 {strides = array<i32>} : memref<2x32xf32, #tpu.memory_space<vmem>>, vector<2x32xf32>,
    %30 = arith.truncf %28 : vector<2x32xf32> to vector<2x32xbf16>
    %c0_18 = arith.constant 0 : index
    %c0_19 = arith.constant 0 : index
    %31 = vector.load %arg6[%c0_18, %c0_19] : memref<32x128xbf16, #tpu.memory_space<vmem>>, vector<32x128xbf16>
    %cst_20 = arith.constant dense<0.000000e+00> : vector<2x128xf32>
    %32 = tpu.matmul %30, %31, %cst_20 {dimension_numbers = #tpu.dot_dimension_numbers<[1], [0], [0], [1], [0, 0, 1, 1], [], []>} : vector<2x32xbf16>, vector<32x128xbf16>, vector<2x128xf32> -> vector<2x128xf32>
    %c0_21 = arith.constant 0 : index
    %c0_22 = arith.constant 0 : index
    %33 = vector.load %arg7[%c0_21, %c0_22] : memref<1x128xf32, #tpu.memory_space<vmem>>, vector<1x128xf32>
    %34 = vector.broadcast %33 : vector<1x128xf32> to vector<2x128xf32>
    %35 = arith.addf %32, %34 : vector<2x128xf32>
    %c0_23 = arith.constant 0 : index
    %c0_24 = arith.constant 0 : index
    %36 = vector.load %arg8[%c0_23, %c0_24] : memref<2x128xf32, #tpu.memory_space<vmem>>, vector<2x128xf32>
    %37 = arith.mulf %35, %36 : vector<2x128xf32>
    %c0_25 = arith.constant 0 : index
    %c0_26 = arith.constant 0 : index
    %38 = vector.load %arg9[%c0_25, %c0_26] : memref<128x16xf32, #tpu.memory_space<vmem>>, vector<128x16xf32>
    %cst_27 = arith.constant dense<0.000000e+00> : vector<2x16xf32>
    %39 = tpu.matmul %37, %38, %cst_27 {dimension_numbers = #tpu.dot_dimension_numbers<[1], [0], [0], [1], [0, 0, 1, 1], [], []>} : vector<2x128xf32>, vector<128x16xf32>, vector<2x16xf32> -> vector<2x16xf32>
    %c0_28 = arith.constant 0 : index
    %c0_29 = arith.constant 0 : index
    %40 = vector.load %arg11[%c0_28, %c0_29] : memref<2x16xf32, #tpu.memory_space<vmem>>, vector<2x16xf32>
    tpu.vector_store %arg11[%c0_28, %c0_29], %39 {strides = array<i32>} : memref<2x16xf32, #tpu.memory_space<vmem>>, vector<2x16xf32>,
    return
  }
  func.func @transform_0(%arg0: i32) -> (i32, i32) {
    %c0_i32 = arith.constant 0 : i32
    %c0_i32_0 = arith.constant 0 : i32
    return %arg0, %c0_i32 : i32, i32
  }
  func.func @transform_1(%arg0: i32) -> (i32, i32) {
    %c0_i32 = arith.constant 0 : i32
    %c0_i32_0 = arith.constant 0 : i32
    %c0_i32_1 = arith.constant 0 : i32
    return %c0_i32, %c0_i32_0 : i32, i32
  }
  func.func @transform_2(%arg0: i32) -> (i32, i32) {
    %c0_i32 = arith.constant 0 : i32
    %c0_i32_0 = arith.constant 0 : i32
    %c0_i32_1 = arith.constant 0 : i32
    return %c0_i32, %c0_i32_0 : i32, i32
  }
  func.func @transform_3(%arg0: i32) -> (i32, i32) {
    %c0_i32 = arith.constant 0 : i32
    %c0_i32_0 = arith.constant 0 : i32
    %c0_i32_1 = arith.constant 0 : i32
    return %c0_i32, %c0_i32_0 : i32, i32
  }
  func.func @transform_4(%arg0: i32) -> (i32, i32) {
    %c0_i32 = arith.constant 0 : i32
    %c0_i32_0 = arith.constant 0 : i32
    %c0_i32_1 = arith.constant 0 : i32
    return %c0_i32, %c0_i32_0 : i32, i32
  }
  func.func @transform_5(%arg0: i32) -> (i32, i32) {
    %c0_i32 = arith.constant 0 : i32
    %c0_i32_0 = arith.constant 0 : i32
    %c0_i32_1 = arith.constant 0 : i32
    return %c0_i32, %c0_i32_0 : i32, i32
  }
  func.func @transform_6(%arg0: i32) -> (i32, i32) {
    %c0_i32 = arith.constant 0 : i32
    %c0_i32_0 = arith.constant 0 : i32
    %c0_i32_1 = arith.constant 0 : i32
    return %c0_i32, %c0_i32_0 : i32, i32
  }
  func.func @transform_7(%arg0: i32) -> (i32, i32) {
    %c0_i32 = arith.constant 0 : i32
    %c0_i32_0 = arith.constant 0 : i32
    return %arg0, %c0_i32 : i32, i32
  }
  func.func @transform_8(%arg0: i32) -> (i32, i32) {
    %c0_i32 = arith.constant 0 : i32
    %c0_i32_0 = arith.constant 0 : i32
    %c0_i32_1 = arith.constant 0 : i32
    return %c0_i32, %c0_i32_0 : i32, i32
  }
  func.func @transform_9(%arg0: i32) -> (i32, i32) {
    %c0_i32 = arith.constant 0 : i32
    %c0_i32_0 = arith.constant 0 : i32
    return %arg0, %c0_i32 : i32, i32
  }
  func.func @transform_10(%arg0: i32) -> (i32, i32) {
    %c0_i32 = arith.constant 0 : i32
    %c0_i32_0 = arith.constant 0 : i32
    return %arg0, %c0_i32 : i32, i32
  }
}

</mosaic_0001>

<llo_original>
// kernel: tpu_custom_call.1
$region0: #{tpu_custom_call.1}
  #allocation0 [shape = 'u32[]', space=smem, size = 0x4, offset = 0x4, fixed_abs, tag = 'smem constant byte address 0x4 - core index']
  #allocation1 [shape = 'u32[144,128]{1,0:T(1,128)}', space=vmem, size = 0x12000, scoped, tag = 'internal scratch']
  %s0 = inlined_call_operand.vmem [shape: bf16[16,32], index: 0, kind: input, shape index: {}]
  %s1 = inlined_call_operand.vmem [shape: bf16[32,32], index: 1, kind: input, shape index: {}]
  %s2 = inlined_call_operand.vmem [shape: f32[1,32], index: 2, kind: input, shape index: {}]
  %s3 = inlined_call_operand.vmem [shape: bf16[32,32], index: 3, kind: input, shape index: {}]
  %s4 = inlined_call_operand.vmem [shape: f32[1,32], index: 4, kind: input, shape index: {}]
  %s5 = inlined_call_operand.vmem [shape: bf16[32,128], index: 5, kind: input, shape index: {}]
  %s6 = inlined_call_operand.vmem [shape: f32[1,128], index: 6, kind: input, shape index: {}]
  %s7 = inlined_call_operand.vmem [shape: f32[2,128], index: 7, kind: input, shape index: {}]
  %s8 = inlined_call_operand.vmem [shape: f32[128,16], index: 8, kind: input, shape index: {}]
  %s9 = inlined_call_operand.hbm [shape: f32[2,32], index: 9, kind: output, shape index: {0}]
  %s10 = inlined_call_operand.hbm [shape: f32[2,16], index: 10, kind: output, shape index: {1}]
  %11 = xla_tuple %s9, %s10
  %s12 = sld [smem:[#allocation0]]
  $region54: #{tpu_custom_call.1} parent=0
    _
  %s14 = ssub.s32 1, %s12
  %s15 = scalar_select 0, %s14, %s12
  $region1: #{tpu_custom_call.1} parent=0
    #allocation2 [shape = 'u8[1024]{0}', space=vmem, size = 0x400, scoped, tag = 'output window, operand 0, single buffered']
    #allocation3 [shape = 's32[1]{0}', space=sflag, size = 0x4, scoped, tag = 'scoped memory for tpu_custom_call.1']
    #allocation4 [shape = 'u8[1024]{0}', space=vmem, size = 0x400, scoped, tag = 'output window, operand 1, single buffered']
    #allocation5 [shape = 's32[1]{0}', space=sflag, size = 0x4, scoped, tag = 'scoped memory for tpu_custom_call.1']
    %16 = vsyncpa [#allocation3], 0
    %17 = vsyncpa [#allocation5], 0
    // Predicated region
    $region2: #{tpu_custom_call.1} parent=1 // pred_check
      _
    $region3: #{tpu_custom_call.1} parent=1 // pred_check_branch
      %19 = sbr.rel (0) target = $region5
    $region4: #{tpu_custom_call.1} parent=1 // pred_region
      _
    $region5: #{tpu_custom_call.1} parent=1 // pred_fallthru
      _
    // Predicated region
    $region6: #{tpu_custom_call.1} parent=1 // pred_check
      _
    $region7: #{tpu_custom_call.1} parent=1 // pred_check_branch
      %21 = sbr.rel (0) target = $region9
    $region8: #{tpu_custom_call.1} parent=1 // pred_region
      _
    $region9: #{tpu_custom_call.1} parent=1 // pred_fallthru
      _
    // Predicated region
    $region10: #{tpu_custom_call.1} parent=1 // pred_check
      _
    $region11: #{tpu_custom_call.1} parent=1 // pred_check_branch
      %23 = sbr.rel (0) target = $region13
    $region12: #{tpu_custom_call.1} parent=1 // pred_region
      _
    $region13: #{tpu_custom_call.1} parent=1 // pred_fallthru
      _
    // Predicated region
    $region14: #{tpu_custom_call.1} parent=1 // pred_check
      _
    $region15: #{tpu_custom_call.1} parent=1 // pred_check_branch
      %25 = sbr.rel (0) target = $region17
    $region16: #{tpu_custom_call.1} parent=1 // pred_region
      _
    $region17: #{tpu_custom_call.1} parent=1 // pred_fallthru
      _
    // Predicated region
    $region18: #{tpu_custom_call.1} parent=1 // pred_check
      _
    $region19: #{tpu_custom_call.1} parent=1 // pred_check_branch
      %27 = sbr.rel (0) target = $region21
    $region20: #{tpu_custom_call.1} parent=1 // pred_region
      _
    $region21: #{tpu_custom_call.1} parent=1 // pred_fallthru
      _
    // Predicated region
    $region22: #{tpu_custom_call.1} parent=1 // pred_check
      _
    $region23: #{tpu_custom_call.1} parent=1 // pred_check_branch
      %29 = sbr.rel (0) target = $region25
    $region24: #{tpu_custom_call.1} parent=1 // pred_region
      _
    $region25: #{tpu_custom_call.1} parent=1 // pred_fallthru
      _
    // Predicated region
    $region26: #{tpu_custom_call.1} parent=1 // pred_check
      _
    $region27: #{tpu_custom_call.1} parent=1 // pred_check_branch
      %31 = sbr.rel (0) target = $region29
    $region28: #{tpu_custom_call.1} parent=1 // pred_region
      _
    $region29: #{tpu_custom_call.1} parent=1 // pred_fallthru
      _
    // Predicated region
    $region30: #{tpu_custom_call.1} parent=1 // pred_check
      _
    $region31: #{tpu_custom_call.1} parent=1 // pred_check_branch
      %33 = sbr.rel (0) target = $region33
    $region32: #{tpu_custom_call.1} parent=1 // pred_region
      _
    $region33: #{tpu_custom_call.1} parent=1 // pred_fallthru
      _
    // Predicated region
    $region34: #{tpu_custom_call.1} parent=1 // pred_check
      _
    $region35: #{tpu_custom_call.1} parent=1 // pred_check_branch
      %35 = sbr.rel (0) target = $region37
    $region36: #{tpu_custom_call.1} parent=1 // pred_region
      _
    $region37: #{tpu_custom_call.1} parent=1 // pred_fallthru
      _
    %v37 = vld [vmem:[%s0] sm:$0xf]
    %v38 = vld [vmem:[%s0 + $0x4] sm:$0xf]
    %v39 = vld [vmem:[%s1] sm:$0xf]
    %v40 = vld [vmem:[%s1 + $0x4] sm:$0xf]
    %v41 = vld [vmem:[%s1 + $0x8] sm:$0xf]
    %v42 = vld [vmem:[%s1 + $0xc] sm:$0xf]
    %v43 = vld [vmem:[%s2] sm:$0x1]
    %v45 = vlaneseq
    %v46 = vshrl.u32 %v45, 7
    %v47 = vsub.s32 0, %v46
    %v48 = vrot.slane %v43, %v47
    %v52 = vunpack.c.l.b16 %v37
    %v53 = vunpack.c.l.b16 %v38
    %v54 = vpack.c.b16 %v53, %v52
    %v59 = vunpack.c.l.b16 %v39
    %v60 = vunpack.c.l.b16 %v40
    %v61 = vunpack.c.l.b16 %v41
    %v62 = vunpack.c.l.b16 %v42
    %v63 = vpack.c.b16 %v60, %v59
    %v64 = vpack.c.b16 %v62, %v61
    %vm67 = vcmask 261120
    %v69 = vsel %vm67, %v54, 0
    %71 = vmatprep.subr.bf16.mxu0 0
    %72 = vmatpush1.bf16.msra.mxu0 %v63
    %73 = vmatprep.subr.bf16.mxu0 0
    %74 = vmatpush1.bf16.msra.mxu0 %v64
    %75 = vmatprep.subr.bf16.mxu0 0
    %76 = vmatpush1.bf16.msra.mxu0 0
    %77 = vmatprep.subr.bf16.mxu0 0
    %78 = vmatpush1.bf16.msra.mxu0 0
    %79 = vmatprep.subr.bf16.mxu0 0
    %80 = vmatpush1.bf16.msra.mxu0 0
    %81 = vmatprep.subr.bf16.mxu0 0
    %82 = vmatpush1.bf16.msra.mxu0 0
    %83 = vmatprep.subr.bf16.mxu0 0
    %84 = vmatpush1.bf16.msra.mxu0 0
    %85 = vmatprep.subr.bf16.mxu0 0
    %86 = vmatpush1.bf16.msra.mxu0 0
    %87 = vmatprep.subr.bf16.mxu0 0
    %88 = vmatpush1.bf16.msra.mxu0 0
    %89 = vmatprep.subr.bf16.mxu0 0
    %90 = vmatpush1.bf16.msra.mxu0 0
    %91 = vmatprep.subr.bf16.mxu0 0
    %92 = vmatpush1.bf16.msra.mxu0 0
    %93 = vmatprep.subr.bf16.mxu0 0
    %94 = vmatpush1.bf16.msra.mxu0 0
    %95 = vmatprep.subr.bf16.mxu0 0
    %96 = vmatpush1.bf16.msra.mxu0 0
    %97 = vmatprep.subr.bf16.mxu0 0
    %98 = vmatpush1.bf16.msra.mxu0 0
    %99 = vmatprep.subr.bf16.mxu0 0
    %100 = vmatpush1.bf16.msra.mxu0 0
    %101 = vmatprep.subr.bf16.mxu0 0
    %102 = vmatpush1.bf16.msra.mxu0 0
    %103 = vmatprep.mubr.bf16.mxu0 0
    %104 = vmatmul.mubr.bf16.gmra.mrb[0].mxu0 %v69
    %v105 = vpop.f32.mrb[0].mxu0
    %v106 = vadd.f32 %v48, %v105
    %v107 = vpop.f32.mrb[0].mxu0
    %v108 = vpop.f32.mrb[0].mxu0
    %v109 = vadd.f32 %v48, %v108
    %v110 = vpop.f32.mrb[0].mxu0
    %111 = vdwg.mxu0
    %v112 = vmul.f32 %v106, %v106
    %v113 = vmul.f32 %v109, %v109
    %v114 = vmul.f32 %v106, %v112
    %v115 = vmul.f32 %v109, %v113
    %v116 = vmul.f32 %v114, 0.044715
    %v117 = vmul.f32 %v115, 0.044715
    %v118 = vadd.f32 %v106, %v116
    %v119 = vadd.f32 %v109, %v117
    %v120 = vmul.f32 %v118, 0.7978846
    %v121 = vmul.f32 %v119, 0.7978846
    %v122 = vtanh.pop %v120
    %v123 = vtanh.pop %v121
    %v124 = vadd.f32 %v122, 1.0
    %v125 = vadd.f32 %v123, 1.0
    %v126 = vmul.f32 %v124, 0.5
    %v127 = vmul.f32 %v125, 0.5
    %v128 = vmul.f32 %v106, %v126
    %v129 = vmul.f32 %v109, %v127
    %v130 = vsel %vm67, %v128, 0.0
    %v131 = vrot.slane %v130, 4
    %v132 = vadd.f32 %v130, %v131
    %v133 = vrot.slane %v132, 2
    %v134 = vadd.f32 %v132, %v133
    %v135 = vrot.slane %v134, 1
    %v136 = vadd.f32 %v134, %v135
    %v137 = vsel %vm67, %v129, 0.0
    %v138 = vrot.slane %v137, 4
    %v139 = vadd.f32 %v137, %v138
    %v140 = vrot.slane %v139, 2
    %v141 = vadd.f32 %v139, %v140
    %v142 = vrot.slane %v141, 1
    %v143 = vadd.f32 %v141, %v142
    %v144 = vrcp.pop 8.0
    %v145 = vmul.f32 %v136, %v144
    %v146 = vmul.f32 %v143, %v144
    %v147 = vpack.c.bf16 %v145, %v145
    %v148 = vpack.c.bf16 %v146, %v146
    %v149 = vld [vmem:[%s3] sm:$0xf]
    %v150 = vld [vmem:[%s3 + $0x4] sm:$0xf]
    %v151 = vld [vmem:[%s3 + $0x8] sm:$0xf]
    %v152 = vld [vmem:[%s3 + $0xc] sm:$0xf]
    %v153 = vld [vmem:[%s4] sm:$0x1]
    %v155 = vlaneseq
    %v156 = vshrl.u32 %v155, 7
    %v157 = vsub.s32 0, %v156
    %v158 = vrot.slane %v153, %v157
    %v162 = vunpack.c.l.b16 %v147
    %v163 = vunpack.c.l.b16 %v148
    %vm164 = vcmask 1041409
    %v165 = vsel %vm164, %v163, %v162
    %v166 = vpack.c.b16 %v165, %v165
    %v171 = vunpack.c.l.b16 %v149
    %v172 = vunpack.c.l.b16 %v150
    %v173 = vunpack.c.l.b16 %v151
    %v174 = vunpack.c.l.b16 %v152
    %v175 = vpack.c.b16 %v172, %v171
    %v176 = vpack.c.b16 %v174, %v173
    %v180 = vsel %vm67, %v166, 0
    %182 = vmatprep.subr.bf16.mxu0 0
    %183 = vmatpush1.bf16.msra.mxu0 %v175
    %184 = vmatprep.subr.bf16.mxu0 0
    %185 = vmatpush1.bf16.msra.mxu0 %v176
    %186 = vmatprep.subr.bf16.mxu0 0
    %187 = vmatpush1.bf16.msra.mxu0 0
    %188 = vmatprep.subr.bf16.mxu0 0
    %189 = vmatpush1.bf16.msra.mxu0 0
    %190 = vmatprep.subr.bf16.mxu0 0
    %191 = vmatpush1.bf16.msra.mxu0 0
    %192 = vmatprep.subr.bf16.mxu0 0
    %193 = vmatpush1.bf16.msra.mxu0 0
    %194 = vmatprep.subr.bf16.mxu0 0
    %195 = vmatpush1.bf16.msra.mxu0 0
    %196 = vmatprep.subr.bf16.mxu0 0
    %197 = vmatpush1.bf16.msra.mxu0 0
    %198 = vmatprep.subr.bf16.mxu0 0
    %199 = vmatpush1.bf16.msra.mxu0 0
    %200 = vmatprep.subr.bf16.mxu0 0
    %201 = vmatpush1.bf16.msra.mxu0 0
    %202 = vmatprep.subr.bf16.mxu0 0
    %203 = vmatpush1.bf16.msra.mxu0 0
    %204 = vmatprep.subr.bf16.mxu0 0
    %205 = vmatpush1.bf16.msra.mxu0 0
    %206 = vmatprep.subr.bf16.mxu0 0
    %207 = vmatpush1.bf16.msra.mxu0 0
    %208 = vmatprep.subr.bf16.mxu0 0
    %209 = vmatpush1.bf16.msra.mxu0 0
    %210 = vmatprep.subr.bf16.mxu0 0
    %211 = vmatpush1.bf16.msra.mxu0 0
    %212 = vmatprep.subr.bf16.mxu0 0
    %213 = vmatpush1.bf16.msra.mxu0 0
    %214 = vmatprep.mubr.bf16.mxu0 0
    %215 = vmatmul.mubr.bf16.gmra.mrb[0].mxu0 %v180
    %v216 = vpop.f32.mrb[0].mxu0
    %v217 = vadd.f32 %v158, %v216
    %v218 = vpop.f32.mrb[0].mxu0
    %v219 = vpop.f32.mrb[0].mxu0
    %v220 = vpop.f32.mrb[0].mxu0
    %221 = vdwg.mxu0
    %vm222 = vcmask 254976
    %223 = vst.msk [vmem:[#allocation2] sm:$0x3] %vm222, %v217
    %v224 = vpack.c.bf16 %v217, %v217
    %v225 = vld [vmem:[%s5] sm:$0xf]
    %v226 = vld [vmem:[%s5 + $0x4] sm:$0xf]
    %v227 = vld [vmem:[%s5 + $0x8] sm:$0xf]
    %v228 = vld [vmem:[%s5 + $0xc] sm:$0xf]
    %v229 = vld [vmem:[%s6] sm:$0x1]
    %v231 = vlaneseq
    %v232 = vshrl.u32 %v231, 7
    %v233 = vsub.s32 0, %v232
    %v234 = vrot.slane %v229, %v233
    %v240 = vunpack.c.l.b16 %v225
    %v241 = vunpack.c.l.b16 %v226
    %v242 = vunpack.c.l.b16 %v227
    %v243 = vunpack.c.l.b16 %v228
    %v244 = vpack.c.b16 %v241, %v240
    %v245 = vpack.c.b16 %v243, %v242
    %v249 = vsel %vm67, %v224, 0
    %251 = vmatprep.subr.bf16.mxu0 0
    %252 = vmatpush1.bf16.msra.mxu0 %v244
    %253 = vmatprep.subr.bf16.mxu0 0
    %254 = vmatpush1.bf16.msra.mxu0 %v245
    %255 = vmatprep.subr.bf16.mxu0 0
    %256 = vmatpush1.bf16.msra.mxu0 0
    %257 = vmatprep.subr.bf16.mxu0 0
    %258 = vmatpush1.bf16.msra.mxu0 0
    %259 = vmatprep.subr.bf16.mxu0 0
    %260 = vmatpush1.bf16.msra.mxu0 0
    %261 = vmatprep.subr.bf16.mxu0 0
    %262 = vmatpush1.bf16.msra.mxu0 0
    %263 = vmatprep.subr.bf16.mxu0 0
    %264 = vmatpush1.bf16.msra.mxu0 0
    %265 = vmatprep.subr.bf16.mxu0 0
    %266 = vmatpush1.bf16.msra.mxu0 0
    %267 = vmatprep.subr.bf16.mxu0 0
    %268 = vmatpush1.bf16.msra.mxu0 0
    %269 = vmatprep.subr.bf16.mxu0 0
    %270 = vmatpush1.bf16.msra.mxu0 0
    %271 = vmatprep.subr.bf16.mxu0 0
    %272 = vmatpush1.bf16.msra.mxu0 0
    %273 = vmatprep.subr.bf16.mxu0 0
    %274 = vmatpush1.bf16.msra.mxu0 0
    %275 = vmatprep.subr.bf16.mxu0 0
    %276 = vmatpush1.bf16.msra.mxu0 0
    %277 = vmatprep.subr.bf16.mxu0 0
    %278 = vmatpush1.bf16.msra.mxu0 0
    %279 = vmatprep.subr.bf16.mxu0 0
    %280 = vmatpush1.bf16.msra.mxu0 0
    %281 = vmatprep.subr.bf16.mxu0 0
    %282 = vmatpush1.bf16.msra.mxu0 0
    %283 = vmatprep.mubr.bf16.mxu0 0
    %284 = vmatmul.mubr.bf16.gmra.mrb[0].mxu0 %v249
    %v285 = vpop.f32.mrb[0].mxu0
    %v286 = vadd.f32 %v234, %v285
    %v287 = vpop.f32.mrb[0].mxu0
    %v288 = vpop.f32.mrb[0].mxu0
    %v289 = vpop.f32.mrb[0].mxu0
    %290 = vdwg.mxu0
    %v291 = vld [vmem:[%s7] sm:$0x3]
    %v292 = vmul.f32 %v286, %v291
    %v293 = vld [vmem:[%s8] sm:$0xff]
    %v294 = vld [vmem:[%s8 + $0x8] sm:$0xff]
    %v295 = vld [vmem:[%s8 + $0x10] sm:$0xff]
    %v296 = vld [vmem:[%s8 + $0x18] sm:$0xff]
    %v297 = vld [vmem:[%s8 + $0x20] sm:$0xff]
    %v298 = vld [vmem:[%s8 + $0x28] sm:$0xff]
    %v299 = vld [vmem:[%s8 + $0x30] sm:$0xff]
    %v300 = vld [vmem:[%s8 + $0x38] sm:$0xff]
    %v301 = vld [vmem:[%s8 + $0x40] sm:$0xff]
    %v302 = vld [vmem:[%s8 + $0x48] sm:$0xff]
    %v303 = vld [vmem:[%s8 + $0x50] sm:$0xff]
    %v304 = vld [vmem:[%s8 + $0x58] sm:$0xff]
    %v305 = vld [vmem:[%s8 + $0x60] sm:$0xff]
    %v306 = vld [vmem:[%s8 + $0x68] sm:$0xff]
    %v307 = vld [vmem:[%s8 + $0x70] sm:$0xff]
    %v308 = vld [vmem:[%s8 + $0x78] sm:$0xff]
    %309 = vmatprep.subr.mxu0 0.0
    %310 = vmatpush1.msra.mxu0 %v293
    %311 = vmatprep.subr.mxu0 0.0
    %312 = vmatpush1.msra.mxu0 %v294
    %313 = vmatprep.subr.mxu0 0.0
    %314 = vmatpush1.msra.mxu0 %v295
    %315 = vmatprep.subr.mxu0 0.0
    %316 = vmatpush1.msra.mxu0 %v296
    %317 = vmatprep.subr.mxu0 0.0
    %318 = vmatpush1.msra.mxu0 %v297
    %319 = vmatprep.subr.mxu0 0.0
    %320 = vmatpush1.msra.mxu0 %v298
    %321 = vmatprep.subr.mxu0 0.0
    %322 = vmatpush1.msra.mxu0 %v299
    %323 = vmatprep.subr.mxu0 0.0
    %324 = vmatpush1.msra.mxu0 %v300
    %325 = vmatprep.subr.mxu0 0.0
    %326 = vmatpush1.msra.mxu0 %v301
    %327 = vmatprep.subr.mxu0 0.0
    %328 = vmatpush1.msra.mxu0 %v302
    %329 = vmatprep.subr.mxu0 0.0
    %330 = vmatpush1.msra.mxu0 %v303
    %331 = vmatprep.subr.mxu0 0.0
    %332 = vmatpush1.msra.mxu0 %v304
    %333 = vmatprep.subr.mxu0 0.0
    %334 = vmatpush1.msra.mxu0 %v305
    %335 = vmatprep.subr.mxu0 0.0
    %336 = vmatpush1.msra.mxu0 %v306
    %337 = vmatprep.subr.mxu0 0.0
    %338 = vmatpush1.msra.mxu0 %v307
    %339 = vmatprep.subr.mxu0 0.0
    %340 = vmatpush1.msra.mxu0 %v308
    %341 = vmatprep.subr.mxu0 0.0
    %342 = vmatpush1.msra.mxu0 0.0
    %343 = vmatprep.subr.mxu0 0.0
    %344 = vmatpush1.msra.mxu0 0.0
    %345 = vmatprep.subr.mxu0 0.0
    %346 = vmatpush1.msra.mxu0 0.0
    %347 = vmatprep.subr.mxu0 0.0
    %348 = vmatpush1.msra.mxu0 0.0
    %349 = vmatprep.subr.mxu0 0.0
    %350 = vmatpush1.msra.mxu0 0.0
    %351 = vmatprep.subr.mxu0 0.0
    %352 = vmatpush1.msra.mxu0 0.0
    %353 = vmatprep.subr.mxu0 0.0
    %354 = vmatpush1.msra.mxu0 0.0
    %355 = vmatprep.subr.mxu0 0.0
    %356 = vmatpush1.msra.mxu0 0.0
    %357 = vmatprep.subr.mxu0 0.0
    %358 = vmatpush1.msra.mxu0 0.0
    %359 = vmatprep.subr.mxu0 0.0
    %360 = vmatpush1.msra.mxu0 0.0
    %361 = vmatprep.subr.mxu0 0.0
    %362 = vmatpush1.msra.mxu0 0.0
    %363 = vmatprep.subr.mxu0 0.0
    %364 = vmatpush1.msra.mxu0 0.0
    %365 = vmatprep.subr.mxu0 0.0
    %366 = vmatpush1.msra.mxu0 0.0
    %367 = vmatprep.subr.mxu0 0.0
    %368 = vmatpush1.msra.mxu0 0.0
    %369 = vmatprep.subr.mxu0 0.0
    %370 = vmatpush1.msra.mxu0 0.0
    %371 = vmatprep.subr.mxu0 0.0
    %372 = vmatpush1.msra.mxu0 0.0
    %373 = vmatprep.mubr.f32.mxu0 0.0
    %374 = vmatmul.mubr.f32.gmra.mrb[0].mxu0 %v292
    %v375 = vpop.f32.mrb[0].mxu0
    %v376 = vadd.f32 0.0, %v375
    %v377 = vpop.f32.mrb[0].mxu0
    %378 = vdwg.mxu0
    %vm379 = vcmask 123904
    %380 = vst.msk [vmem:[#allocation4] sm:$0x3] %vm379, %v376
    // Predicated region
    $region38: #{tpu_custom_call.1} parent=1 // pred_check
      _
    $region39: #{tpu_custom_call.1} parent=1 // pred_check_branch
      %382 = sbr.rel (0) target = $region41
    $region40: #{tpu_custom_call.1} parent=1 // pred_region
      %s384 = ssub.s32 32, 32
      %385 = vsyncadd [#allocation3], %s384
      %s387 = sshll.u32 [#allocation2], 4
      %s388 = int_to_ptr.vmem [resolvable:$true] %s387
      %390 = dma.vmem_to_hbm [thread:$0]  %s388, 32, %s9, [#allocation3]
    $region41: #{tpu_custom_call.1} parent=1 // pred_fallthru
      _
    // Predicated region
    $region42: #{tpu_custom_call.1} parent=1 // pred_check
      _
    $region43: #{tpu_custom_call.1} parent=1 // pred_check_branch
      %392 = sbr.rel (0) target = $region45
    $region44: #{tpu_custom_call.1} parent=1 // pred_region
      %s394 = ssub.s32 32, 32
      %395 = vsyncadd [#allocation5], %s394
      %s397 = sshll.u32 [#allocation4], 4
      %s398 = int_to_ptr.vmem [resolvable:$true] %s397
      %400 = dma.vmem_to_hbm [thread:$0]  %s398, 32, %s10, [#allocation5]
    $region45: #{tpu_custom_call.1} parent=1 // pred_fallthru
      _
    // Predicated region
    $region46: #{tpu_custom_call.1} parent=1 // pred_check
      _
    $region47: #{tpu_custom_call.1} parent=1 // pred_check_branch
      %402 = sbr.rel (0) target = $region49
    $region48: #{tpu_custom_call.1} parent=1 // pred_region
      %403 = dma.done [#allocation3], 32
    $region49: #{tpu_custom_call.1} parent=1 // pred_fallthru
      _
    // Predicated region
    $region50: #{tpu_custom_call.1} parent=1 // pred_check
      _
    $region51: #{tpu_custom_call.1} parent=1 // pred_check_branch
      %405 = sbr.rel (0) target = $region53
    $region52: #{tpu_custom_call.1} parent=1 // pred_region
      %406 = dma.done [#allocation5], 32
    $region53: #{tpu_custom_call.1} parent=1 // pred_fallthru
      _
    %407 = vsyncpa [#allocation3], 1
    %408 = vsyncpa [#allocation5], 1

</llo_original>
